<compile_context>
chip_gen: v6e
topology: v6e:2x2x1
jax: 0.10.0
libtpu: 0.0.40
codegen_flags: <defaults>
</compile_context>

<pallas_src>
import functools

import jax
import jax.numpy as jnp
from jax.experimental import pallas as pl
from jax.experimental.pallas import tpu as pltpu


def _round_up(x, m):
    return ((x + m - 1) // m) * m


def _conv1d_kernel(cur_ref, nxt_ref, w_ref, b_ref, o_ref, *scratch,
                   kernel_size, dilation, t_tile, halo_rows):
    """One (batch, time-tile) grid step.

    cur_ref: (1, Tt, C_in)        current time tile of the padded input
    nxt_ref: (1, halo_r, C_in)    halo rows immediately after the tile
    w_ref:   (K, C_in, C_out_p)   weights (resident)
    b_ref:   (1, C_out_p)         float32 bias
    o_ref:   (1, Tt, C_out_p)     output tile (lane-dense)
    scratch: optionally one (Tt + halo_r, C_in) VMEM slab buffer (only when K > 1)
    """
    bias = b_ref[...]                                        # (1, C_out_p) f32

    if not scratch:
        # kernel_size == 1: no halo, no slab copy, single matmul.
        acc = jnp.dot(cur_ref[0], w_ref[0],
                      preferred_element_type=jnp.float32) + bias
    else:
        slab_ref = scratch[0]
        # One aligned copy of tile + halo into a contiguous slab; per-tap reads below are
        # then plain ref-offset vector loads (no value-level concatenate/slice copies).
        slab_ref[pl.ds(0, t_tile), :] = cur_ref[0]
        slab_ref[pl.ds(t_tile, halo_rows), :] = nxt_ref[0]
        # Chain the per-tap matmuls into one accumulating value; bias folded into tap 0.
        acc = jnp.dot(slab_ref[pl.ds(0, t_tile), :], w_ref[0],
                      preferred_element_type=jnp.float32) + bias
        for k in range(1, kernel_size):
            acc = acc + jnp.dot(slab_ref[pl.ds(k * dilation, t_tile), :], w_ref[k],
                                preferred_element_type=jnp.float32)

    o_ref[0] = acc.astype(o_ref.dtype)


def _vmem_capacity_bytes():
    """Per-TensorCore VMEM capacity (v5e/v6e: 128 MiB, v7x: 64 MiB)."""
    try:
        cap = getattr(pltpu.get_tpu_info(), "vmem_capacity_bytes", None)
        if cap:
            return int(cap)
    except Exception:
        pass
    return 64 * 2**20   # conservative fallback (v7x per-core)


def conv_module_forward(x, weight, bias, *, stride=1, padding=0, dilation=1,
                        mxu_dtype=None, time_tile=None):
    """Equivalent of Conv.forward.

    x:      (B, T, C_in)      channels-last (== PyTorch input before its transpose)
    weight: (C_out, C_in, K)  PyTorch nn.Conv1d weight layout
    bias:   (C_out,)
    mxu_dtype: optional dtype fed to the MXU. None (default) keeps x.dtype — no silent
               downcast; pass jnp.bfloat16 to opt in. Accumulation is always f32.
    returns (B, T_out, C_out) in x.dtype
    """
    # TODO(synk): stride > 1 would need a strided time slice inside the kernel; not needed
    # for the FastSpeech Conv usage (stride defaults to 1).
    assert stride == 1, "only stride=1 is implemented"

    B, T, C_in = x.shape
    C_out, C_in_w, K = weight.shape
    assert C_in_w == C_in
    out_dtype = x.dtype
    compute_dtype = jnp.dtype(out_dtype if mxu_dtype is None else mxu_dtype)
    in_b = compute_dtype.itemsize
    out_b = jnp.dtype(out_dtype).itemsize

    halo = dilation * (K - 1)
    T_out = T + 2 * padding - halo
    assert T_out > 0, "empty output"

    # Sublane packing granularity: 32-bit -> 8 rows, 16-bit -> 16, 8-bit -> 32.
    sub = 8 * max(1, 4 // in_b)
    halo_r = max(sub, pl.next_power_of_2(max(halo, 1)))       # power of two >= halo, >= sub
    # Time tile: power of two, multiple of halo_r, as big as the VMEM budget allows
    # (fewer grid steps, longer DMAs), capped at 2048.
    tt_cap = 2048 if time_tile is None else pl.next_power_of_2(max(int(time_tile), sub))
    Tt = min(tt_cap, pl.next_power_of_2(max(T_out, sub)))
    Tt = max(Tt, halo_r, sub)

    C_out_p = _round_up(C_out, 128)        # lane-dense output stores / full MXU N dim
    lane_cin = _round_up(C_in, 128)
    sub_cin = _round_up(C_in, sub)

    def vmem_bytes(tt):
        b = 2 * tt * lane_cin * in_b                 # current tile (double-buffered)
        b += 2 * halo_r * lane_cin * in_b            # halo tile (double-buffered)
        b += 2 * tt * C_out_p * out_b                # output tile (double-buffered)
        b += 2 * K * sub_cin * C_out_p * in_b        # weights (Pallas double-buffers even
                                                     #   with a constant index_map)
        b += 2 * 8 * C_out_p * 4                     # bias (double-buffered, sublane-padded)
        if halo > 0:
            b += (tt + halo_r) * lane_cin * in_b     # slab scratch
        b += tt * C_out_p * 4                        # live f32 accumulator value
        b += tt * lane_cin * in_b                    # per-tap load temporary / headroom
        return b

    vmem_cap = _vmem_capacity_bytes()                # per TensorCore (v7x has 2 TCs/chip)
    budget = max(12 * 2**20, int(vmem_cap * 0.45))
    while vmem_bytes(Tt) > budget and Tt // 2 >= max(halo_r, sub):
        Tt //= 2

    nt = pl.cdiv(T_out, Tt)
    Tp = nt * Tt + halo_r                  # padded time length seen by the kernel
    right_pad = Tp - padding - T
    assert right_pad >= 0

    # TODO(synk): the zero padding along time is still a wrapper-side jnp.pad (one extra
    # HBM round-trip of x); doing it in-kernel needs edge-tile masking, left out here.
    x_pad = jnp.pad(x, ((0, 0), (padding, right_pad), (0, 0)))
    if x_pad.dtype != compute_dtype:
        x_pad = x_pad.astype(compute_dtype)

    w_kern = jnp.transpose(weight, (2, 1, 0)).astype(compute_dtype)       # (K, C_in, C_out)
    w_kern = jnp.pad(w_kern, ((0, 0), (0, 0), (0, C_out_p - C_out)))      # pad C_out
    b_kern = jnp.pad(bias.astype(jnp.float32), (0, C_out_p - C_out)).reshape(1, C_out_p)

    tpb = Tt // halo_r                     # tile size in units of halo blocks
    scratch_shapes = ([pltpu.VMEM((Tt + halo_r, C_in), compute_dtype)]
                      if halo > 0 else [])

    kernel = functools.partial(
        _conv1d_kernel, kernel_size=K, dilation=dilation, t_tile=Tt, halo_rows=halo_r)

    # Advisory cost estimate for the pallas_call itself (halo re-reads and channel
    # padding included; the wrapper-side pad is a separate XLA op).
    flops = int(2 * B * nt * Tt * K * C_in * C_out_p)
    bytes_accessed = int(B * Tp * C_in * in_b
                         + B * nt * halo_r * C_in * in_b
                         + K * C_in * C_out_p * in_b
                         + B * nt * Tt * C_out_p * out_b)
    vmem_limit = int(min(vmem_cap * 7 // 8,
                         max(32 * 2**20, vmem_bytes(Tt) + (8 << 20))))

    out_full = pl.pallas_call(
        kernel,
        out_shape=jax.ShapeDtypeStruct((B, nt * Tt, C_out_p), out_dtype),
        grid_spec=pltpu.PrefetchScalarGridSpec(
            num_scalar_prefetch=0,
            grid=(B, nt),
            in_specs=[
                # current time tile
                pl.BlockSpec((1, Tt, C_in), lambda b, t: (b, t, 0)),
                # halo rows right after the tile (same array, small block)
                pl.BlockSpec((1, halo_r, C_in), lambda b, t: (b, (t + 1) * tpb, 0)),
                # resident weights / bias
                pl.BlockSpec((K, C_in, C_out_p), lambda b, t: (0, 0, 0)),
                pl.BlockSpec((1, C_out_p), lambda b, t: (0, 0)),
            ],
            out_specs=pl.BlockSpec((1, Tt, C_out_p), lambda b, t: (b, t, 0)),
            scratch_shapes=scratch_shapes,
        ),
        compiler_params=pltpu.CompilerParams(
            dimension_semantics=("parallel", "parallel"),
            vmem_limit_bytes=vmem_limit,
        ),
        cost_estimate=pl.CostEstimate(flops=flops, transcendentals=0,
                                      bytes_accessed=bytes_accessed),
    )(x_pad, x_pad, w_kern, b_kern)

    # Strip time / channel padding.
    return out_full[:, :T_out, :C_out]


def _reference_conv(x, weight, bias, *, padding, dilation):
    """Plain-JAX reference (same math) for correctness checks."""
    C_out, C_in, K = weight.shape
    x_pad = jnp.pad(x, ((0, 0), (padding, padding), (0, 0)))
    T_out = x.shape[1] + 2 * padding - dilation * (K - 1)
    out = jnp.zeros((x.shape[0], T_out, C_out), jnp.float32)
    for k in range(K):
        xs = x_pad[:, k * dilation:k * dilation + T_out, :]
        out = out + jnp.einsum("btc,oc->bto", xs, weight[:, :, k],
                               precision=jax.lax.Precision.HIGHEST)
    return out + bias[None, None, :]


if __name__ == "__main__":
    def _run_case(name, B, T, C_in, C_out, K, padding, dilation, mxu_dtype, atol, rtol):
        key = jax.random.PRNGKey(0)
        kx, kw, kb = jax.random.split(key, 3)
        x = jax.random.normal(kx, (B, T, C_in), dtype=jnp.float32)
        # Deterministic "xavier-like" init for the Conv1d parameters (synthetic).
        fan_in, fan_out = C_in * K, C_out * K
        limit = (6.0 / (fan_in + fan_out)) ** 0.5
        weight = jax.random.uniform(kw, (C_out, C_in, K), dtype=jnp.float32,
                                    minval=-limit, maxval=limit)
        bias = jax.random.uniform(kb, (C_out,), dtype=jnp.float32,
                                  minval=-0.1, maxval=0.1)

        out = conv_module_forward(x, weight, bias, stride=1, padding=padding,
                                  dilation=dilation, mxu_dtype=mxu_dtype)
        out = jax.block_until_ready(out)

        T_out = T + 2 * padding - dilation * (K - 1)
        assert out.shape == (B, T_out, C_out), (name, out.shape)
        ref = _reference_conv(x, weight, bias, padding=padding, dilation=dilation)
        assert jnp.allclose(out.astype(jnp.float32), ref, atol=atol, rtol=rtol), \
            f"mismatch vs reference: {name}"

    # Module default: Conv(in, out) with kernel_size=1, padding=0.
    _run_case("k1_default", 2, 16, 8,   32,  1, 0, 1, None,         3e-3, 3e-3)
    # Typical FastSpeech usage: Conv(in, out, kernel_size=3, padding=1).
    _run_case("k3_f32",     2, 16, 8,   16,  3, 1, 1, None,         3e-3, 3e-3)
    _run_case("k3_bf16",    2, 16, 8,   16,  3, 1, 1, jnp.bfloat16, 1e-1, 1e-1)
    _run_case("wide_f32",   2, 16, 128, 128, 3, 1, 1, None,         3e-3, 3e-3)
    _run_case("dilated",    2, 16, 8,   16,  3, 2, 2, None,         3e-3, 3e-3)

    print("KERNEL_OK")
</pallas_src>

<mosaic_0001>
module attributes {stable_mosaic.version = 11 : i64} {
  func.func @_conv1d_kernel(%arg0: i32, %arg1: i32, %arg2: memref<1x16x8xf32, #tpu.memory_space<vmem>>, %arg3: memref<1x8x8xf32, #tpu.memory_space<vmem>>, %arg4: memref<1x8x128xf32, #tpu.memory_space<vmem>>, %arg5: memref<1x128xf32, #tpu.memory_space<vmem>>, %arg6: memref<1x16x128xf32, #tpu.memory_space<vmem>>) attributes {dimension_semantics = [#tpu.dimension_semantics<parallel>, #tpu.dimension_semantics<parallel>], iteration_bounds = array<i64: 2, 1>, scalar_prefetch = 0 : i64, scratch_operands = 0 : i64, tpu.core_type = #tpu.core_type<tc>, window_params = [{transform_indices = @transform_0, window_bounds = array<i64: 1, 16, 8>}, {transform_indices = @transform_1, window_bounds = array<i64: 1, 8, 8>}, {pipeline_mode = #tpu.pipeline_mode<synchronous>, transform_indices = @transform_2, window_bounds = array<i64: 1, 8, 128>}, {pipeline_mode = #tpu.pipeline_mode<synchronous>, transform_indices = @transform_3, window_bounds = array<i64: 1, 128>}, {transform_indices = @transform_4, window_bounds = array<i64: 1, 16, 128>}]} {
    %c0 = arith.constant 0 : index
    %c0_0 = arith.constant 0 : index
    %0 = vector.load %arg5[%c0, %c0_0] : memref<1x128xf32, #tpu.memory_space<vmem>>, vector<1x128xf32>
    %c0_1 = arith.constant 0 : index
    %c0_2 = arith.constant 0 : index
    %c0_3 = arith.constant 0 : index
    %1 = vector.load %arg2[%c0_1, %c0_2, %c0_3] : memref<1x16x8xf32, #tpu.memory_space<vmem>>, vector<1x16x8xf32>
    %2 = vector.shape_cast %1 : vector<1x16x8xf32> to vector<16x8xf32>
    %c0_4 = arith.constant 0 : index
    %c0_5 = arith.constant 0 : index
    %c0_6 = arith.constant 0 : index
    %3 = vector.load %arg4[%c0_4, %c0_5, %c0_6] : memref<1x8x128xf32, #tpu.memory_space<vmem>>, vector<1x8x128xf32>
    %4 = vector.shape_cast %3 : vector<1x8x128xf32> to vector<8x128xf32>
    %cst = arith.constant dense<0.000000e+00> : vector<16x128xf32>
    %5 = tpu.matmul %2, %4, %cst {dimension_numbers = #tpu.dot_dimension_numbers<[1], [0], [0], [1], [0, 0, 1, 1], [], []>} : vector<16x8xf32>, vector<8x128xf32>, vector<16x128xf32> -> vector<16x128xf32>
    %6 = vector.broadcast %0 : vector<1x128xf32> to vector<16x128xf32>
    %7 = arith.addf %5, %6 : vector<16x128xf32>
    %c0_7 = arith.constant 0 : index
    %c0_8 = arith.constant 0 : index
    %c0_9 = arith.constant 0 : index
    %8 = vector.load %arg6[%c0_7, %c0_8, %c0_9] : memref<1x16x128xf32, #tpu.memory_space<vmem>>, vector<1x16x128xf32>
    %9 = vector.shape_cast %8 : vector<1x16x128xf32> to vector<16x128xf32>
    %10 = vector.shape_cast %7 : vector<16x128xf32> to vector<1x16x128xf32>
    tpu.vector_store %arg6[%c0_7, %c0_8, %c0_9], %10 {strides = array<i32>} : memref<1x16x128xf32, #tpu.memory_space<vmem>>, vector<1x16x128xf32>,
    return
  }
  func.func @transform_0(%arg0: i32, %arg1: i32) -> (i32, i32, i32) {
    %c0_i32 = arith.constant 0 : i32
    %c0_i32_0 = arith.constant 0 : i32
    return %arg0, %arg1, %c0_i32 : i32, i32, i32
  }
  func.func @transform_1(%arg0: i32, %arg1: i32) -> (i32, i32, i32) {
    %c1_i32 = arith.constant 1 : i32
    %0 = arith.addi %arg1, %c1_i32 : i32
    %c2_i32 = arith.constant 2 : i32
    %1 = arith.muli %0, %c2_i32 : i32
    %c0_i32 = arith.constant 0 : i32
    %c0_i32_0 = arith.constant 0 : i32
    return %arg0, %1, %c0_i32 : i32, i32, i32
  }
  func.func @transform_2(%arg0: i32, %arg1: i32) -> (i32, i32, i32) {
    %c0_i32 = arith.constant 0 : i32
    %c0_i32_0 = arith.constant 0 : i32
    %c0_i32_1 = arith.constant 0 : i32
    %c0_i32_2 = arith.constant 0 : i32
    return %c0_i32, %c0_i32_0, %c0_i32_1 : i32, i32, i32
  }
  func.func @transform_3(%arg0: i32, %arg1: i32) -> (i32, i32) {
    %c0_i32 = arith.constant 0 : i32
    %c0_i32_0 = arith.constant 0 : i32
    %c0_i32_1 = arith.constant 0 : i32
    return %c0_i32, %c0_i32_0 : i32, i32
  }
  func.func @transform_4(%arg0: i32, %arg1: i32) -> (i32, i32, i32) {
    %c0_i32 = arith.constant 0 : i32
    %c0_i32_0 = arith.constant 0 : i32
    return %arg0, %arg1, %c0_i32 : i32, i32, i32
  }
}

</mosaic_0001>

<llo_original>
// kernel: tpu_custom_call.1
$region0: #{tpu_custom_call.1}
  #allocation0 [shape = 'u32[]', space=smem, size = 0x4, offset = 0x4, fixed_abs, tag = 'smem constant byte address 0x4 - core index']
  #allocation1 [shape = 'u32[144,128]{1,0:T(1,128)}', space=vmem, size = 0x12000, scoped, tag = 'internal scratch']
  %s0 = inlined_call_operand.vmem [shape: f32[2,24,8], index: 0, kind: input, shape index: {}]
  %s1 = inlined_call_operand.vmem [shape: f32[2,24,8], index: 1, kind: input, shape index: {}]
  %s2 = inlined_call_operand.vmem [shape: f32[1,8,128], index: 2, kind: input, shape index: {}]
  %s3 = inlined_call_operand.vmem [shape: f32[1,128], index: 3, kind: input, shape index: {}]
  %s4 = inlined_call_operand.hbm [shape: f32[2,16,128], index: 4, kind: output, shape index: {}]
  %s5 = sld [smem:[#allocation0]]
  $region49: #{tpu_custom_call.1} parent=0
    _
  %s7 = ssub.s32 1, %s5
  %s8 = scalar_select 0, %s7, %s5
  $region1: #{tpu_custom_call.1} parent=0
    #allocation2 [shape = 'u8[16384]{0}', space=vmem, size = 0x4000, scoped, tag = 'output window, operand 0']
    #allocation3 [shape = 's32[2]{0}', space=sflag, size = 0x8, scoped, tag = 'scoped memory for tpu_custom_call.1']
    %9 = vsyncpa [#allocation3], 0
    %s10 = scalar_lea.sflag [#allocation3], 1
    %11 = vsyncpa %s10, 0
    loop: start=0, step=1, limit=4
    $region2: #{tpu_custom_call.1} parent=1 // loop_pre_header
      _
    $region3: #{tpu_custom_call.1} parent=1 // loop_header
      %s13 = sphi 0, %s17
      %p14 = scmp.ge.s32.totalorder %s13, 4
      %s20 = sphi 0, %s32
      %s21 = sphi 0, %s28
      %s22 = sphi 0, %s20
      %s23 = sphi 0, %s21
      %s24 = sphi 0, %s22
      %s25 = sphi 0, %s23
      %s37 = sphi 0, %s39
      %s40 = sphi 0, %s37
      %s41 = sphi 0, %s40
      %s57 = sphi 0, %s41
      %s69 = sphi 0, %s71
      %s72 = sphi 0, %s69
      %s73 = sphi 0, %s72
      %s89 = sphi 0, %s73
      %s93 = sphi 0, %s93
      %s95 = sphi 0, %s93
      %s96 = sphi 0, %s95
      %s110 = sphi 0, %s96
      %s114 = sphi 0, %s114
      %s116 = sphi 0, %s114
      %s117 = sphi 0, %s116
      %s131 = sphi 0, %s117
      %s139 = sphi 0, %s141
      %s142 = sphi 0, %s139
      %s143 = sphi 0, %s142
      %s159 = sphi 0, %s143
    $region4: #{tpu_custom_call.1} parent=1 // loop_header_branch
      %16 = sbr.rel (%p14) target = $region8
    $region5: #{tpu_custom_call.1} parent=1 // loop_body
      %s18 = ssub.s32 %s13, 1
      %s19 = ssub.s32 %s13, 2
      %s26 = sadd.s32 1, %s21
      %p27 = scmp.ge.s32.totalorder %s26, 1
      %s28 = scalar_select %p27, 0, %s26
      %s29 = sadd.s32 1, %s20
      %s30 = scalar_select %p27, %s29, %s20
      %p31 = scmp.ge.s32.totalorder %s30, 2
      %s32 = scalar_select %p31, 0, %s30
      %s33 = ssub.s32 %s20, %s32
      %s34 = ssub.s32 %s21, %s28
      %s35 = sor.u32 %s33, %s34
      %p36 = scmp.eq.s32.totalorder %s35, 0
      %s38 = sadd.s32 %s37, 1
      %s39 = scalar_select %p36, %s37, %s38
      %p42 = pneg %p36
      %p43 = scmp.eq.s32.totalorder %s13, 1
      %p44 = por %p42, %p43
      %p45 = scmp.ne.s32.totalorder %s37, %s40
      %p46 = scmp.eq.s32.totalorder %s13, 0
      %p47 = por %p45, %p46
      %p48 = scmp.ne.s32.totalorder %s37, %s40
      %p49 = scmp.eq.s32.totalorder %s18, 1
      %p50 = por %p48, %p49
      %p51 = scmp.ne.s32.totalorder %s40, %s41
      %p52 = scmp.eq.s32.totalorder %s18, 0
      %p53 = por %p51, %p52
      %p54 = scmp.ne.s32.totalorder %s40, %s41
      %p55 = scmp.eq.s32.totalorder %s19, 1
      %p56 = por %p54, %p55
      %p58 = scmp.ne.s32.totalorder %s41, %s57
      %p59 = scmp.eq.s32.totalorder %s19, 0
      %p60 = por %p58, %p59
      %s61 = sadd.s32 %s21, 1
      %s62 = smul.u32 %s61, 2
      %s63 = sadd.s32 %s28, 1
      %s64 = smul.u32 %s63, 2
      %s65 = ssub.s32 %s20, %s32
      %s66 = ssub.s32 %s62, %s64
      %s67 = sor.u32 %s65, %s66
      %p68 = scmp.eq.s32.totalorder %s67, 0
      %s70 = sadd.s32 %s69, 1
      %s71 = scalar_select %p68, %s69, %s70
      %p74 = pneg %p68
      %p75 = scmp.eq.s32.totalorder %s13, 1
      %p76 = por %p74, %p75
      %p77 = scmp.ne.s32.totalorder %s69, %s72
      %p78 = scmp.eq.s32.totalorder %s13, 0
      %p79 = por %p77, %p78
      %p80 = scmp.ne.s32.totalorder %s69, %s72
      %p81 = scmp.eq.s32.totalorder %s18, 1
      %p82 = por %p80, %p81
      %p83 = scmp.ne.s32.totalorder %s72, %s73
      %p84 = scmp.eq.s32.totalorder %s18, 0
      %p85 = por %p83, %p84
      %p86 = scmp.ne.s32.totalorder %s72, %s73
      %p87 = scmp.eq.s32.totalorder %s19, 1
      %p88 = por %p86, %p87
      %p90 = scmp.ne.s32.totalorder %s73, %s89
      %p91 = scmp.eq.s32.totalorder %s19, 0
      %p92 = por %p90, %p91
      %s94 = sadd.s32 %s93, 1
      %p97 = scmp.eq.s32.totalorder %s13, 1
      %p98 = scmp.ne.s32.totalorder %s93, %s95
      %p99 = scmp.eq.s32.totalorder %s13, 0
      %p100 = por %p98, %p99
      %p101 = scmp.ne.s32.totalorder %s93, %s95
      %p102 = scmp.eq.s32.totalorder %s18, 1
      %p103 = por %p101, %p102
      %p104 = scmp.ne.s32.totalorder %s95, %s96
      %p105 = scmp.eq.s32.totalorder %s18, 0
      %p106 = por %p104, %p105
      %p107 = scmp.ne.s32.totalorder %s95, %s96
      %p108 = scmp.eq.s32.totalorder %s19, 1
      %p109 = por %p107, %p108
      %p111 = scmp.ne.s32.totalorder %s96, %s110
      %p112 = scmp.eq.s32.totalorder %s19, 0
      %p113 = por %p111, %p112
      %s115 = sadd.s32 %s114, 1
      %p118 = scmp.eq.s32.totalorder %s13, 1
      %p119 = scmp.ne.s32.totalorder %s114, %s116
      %p120 = scmp.eq.s32.totalorder %s13, 0
      %p121 = por %p119, %p120
      %p122 = scmp.ne.s32.totalorder %s114, %s116
      %p123 = scmp.eq.s32.totalorder %s18, 1
      %p124 = por %p122, %p123
      %p125 = scmp.ne.s32.totalorder %s116, %s117
      %p126 = scmp.eq.s32.totalorder %s18, 0
      %p127 = por %p125, %p126
      %p128 = scmp.ne.s32.totalorder %s116, %s117
      %p129 = scmp.eq.s32.totalorder %s19, 1
      %p130 = por %p128, %p129
      %p132 = scmp.ne.s32.totalorder %s117, %s131
      %p133 = scmp.eq.s32.totalorder %s19, 0
      %p134 = por %p132, %p133
      %s135 = ssub.s32 %s20, %s32
      %s136 = ssub.s32 %s21, %s28
      %s137 = sor.u32 %s135, %s136
      %p138 = scmp.eq.s32.totalorder %s137, 0
      %s140 = sadd.s32 %s139, 1
      %s141 = scalar_select %p138, %s139, %s140
      %p144 = pneg %p138
      %p145 = scmp.eq.s32.totalorder %s13, 1
      %p146 = por %p144, %p145
      %p147 = scmp.ne.s32.totalorder %s139, %s142
      %p148 = scmp.eq.s32.totalorder %s13, 0
      %p149 = por %p147, %p148
      %p150 = scmp.ne.s32.totalorder %s139, %s142
      %p151 = scmp.eq.s32.totalorder %s18, 1
      %p152 = por %p150, %p151
      %p153 = scmp.ne.s32.totalorder %s142, %s143
      %p154 = scmp.eq.s32.totalorder %s18, 0
      %p155 = por %p153, %p154
      %p156 = scmp.ne.s32.totalorder %s142, %s143
      %p157 = scmp.eq.s32.totalorder %s19, 1
      %p158 = por %p156, %p157
      %p160 = scmp.ne.s32.totalorder %s143, %s159
      %p161 = scmp.eq.s32.totalorder %s19, 0
      %p162 = por %p160, %p161
      %p163 = scmp.le.s32.totalorder 1, %s13
      %p164 = scmp.lt.s32.totalorder %s13, 3
      %p165 = pnand %p163, %p164
      %p166 = pneg %p165
      // Predicated region
      $region9: #{tpu_custom_call.1} parent=5 // pred_check
        _
      $region10: #{tpu_custom_call.1} parent=5 // pred_check_branch
        %168 = sbr.rel (%p165) target = $region12
      $region11: #{tpu_custom_call.1} parent=5 // pred_region
        %s169 = ssub.s32 %s13, 1
        // Predicated region
        $region13: #{tpu_custom_call.1} parent=11 // pred_check
          %p170 = pneg %p106
        $region14: #{tpu_custom_call.1} parent=11 // pred_check_branch
          %172 = sbr.rel (%p170) target = $region16
        $region15: #{tpu_custom_call.1} parent=11 // pred_region
          _
        $region16: #{tpu_custom_call.1} parent=11 // pred_fallthru
          _
        // Predicated region
        $region17: #{tpu_custom_call.1} parent=11 // pred_check
          %p173 = pneg %p127
        $region18: #{tpu_custom_call.1} parent=11 // pred_check_branch
          %175 = sbr.rel (%p173) target = $region20
        $region19: #{tpu_custom_call.1} parent=11 // pred_region
          _
        $region20: #{tpu_custom_call.1} parent=11 // pred_fallthru
          _
      $region12: #{tpu_custom_call.1} parent=5 // pred_fallthru
        _
      %p176 = scmp.lt.s32.totalorder %s13, 2
      // Predicated region
      $region21: #{tpu_custom_call.1} parent=5 // pred_check
        %p177 = pneg %p176
      $region22: #{tpu_custom_call.1} parent=5 // pred_check_branch
        %179 = sbr.rel (%p177) target = $region24
      $region23: #{tpu_custom_call.1} parent=5 // pred_region
        // Predicated region
        $region25: #{tpu_custom_call.1} parent=23 // pred_check
          %p180 = pneg %p47
        $region26: #{tpu_custom_call.1} parent=23 // pred_check_branch
          %182 = sbr.rel (%p180) target = $region28
        $region27: #{tpu_custom_call.1} parent=23 // pred_region
          %s183 = smul.u32 2, %s21
          %s184 = ssub.s32 3, %s183
          %p185 = scmp.lt.s32.totalorder %s184, 2
          %s186 = scalar_select %p185, %s184, 2
          %s187 = smul.u32 128, %s186
          %p188 = scmp.lt.s32.totalorder %s20, 1
          %s189 = scalar_select %p188, %s20, 1
          %p190 = scmp.lt.s32.totalorder %s183, 2
          %s191 = scalar_select %p190, %s183, 2
          %s192 = smul.addr %s189, 3
          %s193 = sadd.s32 %s191, %s192
          %s194 = smul.addr %s193, 8
          %s195 = scalar_lea.vmem %s0, %s194
          %s196 = smul.u32 2, %s21
          %s197 = ssub.s32 3, %s196
          %p198 = scmp.lt.s32.totalorder %s197, 2
          %s199 = scalar_select %p198, %s197, 2
          %s200 = smul.u32 128, %s199
        $region28: #{tpu_custom_call.1} parent=23 // pred_fallthru
          _
        // Predicated region
        $region29: #{tpu_custom_call.1} parent=23 // pred_check
          %p201 = pneg %p79
        $region30: #{tpu_custom_call.1} parent=23 // pred_check_branch
          %203 = sbr.rel (%p201) target = $region32
        $region31: #{tpu_custom_call.1} parent=23 // pred_region
          %s204 = sadd.s32 %s21, 1
          %s205 = smul.u32 %s204, 2
          %p206 = scmp.lt.s32.totalorder %s20, 1
          %s207 = scalar_select %p206, %s20, 1
          %p208 = scmp.lt.s32.totalorder %s205, 2
          %s209 = scalar_select %p208, %s205, 2
          %s210 = smul.addr %s207, 3
          %s211 = sadd.s32 %s209, %s210
          %s212 = smul.addr %s211, 8
          %s213 = scalar_lea.vmem %s1, %s212
          %s214 = sadd.s32 %s21, 1
          %s215 = smul.u32 %s214, 2
        $region32: #{tpu_custom_call.1} parent=23 // pred_fallthru
          _
      $region24: #{tpu_custom_call.1} parent=5 // pred_fallthru
        _
      %p216 = scmp.le.s32.totalorder 1, %s13
      %p217 = scmp.lt.s32.totalorder %s13, 3
      %p218 = pnand %p216, %p217
      %p219 = pneg %p218
      // Predicated region
      $region33: #{tpu_custom_call.1} parent=5 // pred_check
        _
      $region34: #{tpu_custom_call.1} parent=5 // pred_check_branch
        %221 = sbr.rel (%p218) target = $region36
      $region35: #{tpu_custom_call.1} parent=5 // pred_region
        %s222 = ssub.s32 %s13, 1
        %s223 = smul.u32 2, %s23
        %s224 = ssub.s32 3, %s223
        %p225 = scmp.lt.s32.totalorder %s224, 2
        %s226 = scalar_select %p225, %s224, 2
        %s227 = smul.u32 128, %s226
        %p228 = scmp.lt.s32.totalorder %s22, 1
        %s229 = scalar_select %p228, %s22, 1
        %p230 = scmp.lt.s32.totalorder %s223, 2
        %s231 = scalar_select %p230, %s223, 2
        %s232 = smul.addr %s229, 3
        %s233 = sadd.s32 %s231, %s232
        %s234 = smul.addr %s233, 8
        %s235 = scalar_lea.vmem %s0, %s234
        %p236 = pneg %p53
        %p237 = pneg %p50
        %s238 = sadd.s32 %s23, 1
        %s239 = smul.u32 %s238, 2
        %p240 = scmp.lt.s32.totalorder %s22, 1
        %s241 = scalar_select %p240, %s22, 1
        %p242 = scmp.lt.s32.totalorder %s239, 2
        %s243 = scalar_select %p242, %s239, 2
        %s244 = smul.addr %s241, 3
        %s245 = sadd.s32 %s243, %s244
        %s246 = smul.addr %s245, 8
        %s247 = scalar_lea.vmem %s1, %s246
        %p248 = pneg %p85
        %p249 = pneg %p82
        %p250 = pneg %p106
        %p251 = pneg %p103
        %p252 = pneg %p127
        %p253 = pneg %p124
        %p254 = pneg %p155
        %p255 = pneg %p152
        %s256 = sand.u32 %s142, 1
        %s257 = scalar_lea.sflag [#allocation3], %s256
        %s258 = sand.u32 %s142, 1
        %s259 = smul.addr %s258, 16
        %s260 = scalar_lea.vmem [#allocation2], %s259
        %s261 = smul.u32 2, %s23
        %s262 = ssub.s32 3, %s261
        %p263 = scmp.lt.s32.totalorder %s262, 2
        %s264 = scalar_select %p263, %s262, 2
        %s265 = smul.u32 128, %s264
        %p266 = scmp.lt.s32.totalorder %s22, 1
        %s267 = scalar_select %p266, %s22, 1
        %p268 = scmp.lt.s32.totalorder %s261, 2
        %s269 = scalar_select %p268, %s261, 2
        %s270 = smul.addr %s267, 3
        %s271 = sadd.s32 %s269, %s270
        %s272 = smul.addr %s271, 8
        %s273 = scalar_lea.vmem %s0, %s272
        %s274 = smul.u32 2, %s23
        %s275 = ssub.s32 3, %s274
        %p276 = scmp.lt.s32.totalorder %s275, 2
        %s277 = scalar_select %p276, %s275, 2
        %s278 = smul.u32 128, %s277
        %s279 = sadd.s32 %s23, 1
        %s280 = smul.u32 %s279, 2
        %p281 = scmp.lt.s32.totalorder %s22, 1
        %s282 = scalar_select %p281, %s22, 1
        %p283 = scmp.lt.s32.totalorder %s280, 2
        %s284 = scalar_select %p283, %s280, 2
        %s285 = smul.addr %s282, 3
        %s286 = sadd.s32 %s284, %s285
        %s287 = smul.addr %s286, 8
        %s288 = scalar_lea.vmem %s1, %s287
        %s289 = sadd.s32 %s23, 1
        %s290 = smul.u32 %s289, 2
        %s291 = smul.u32 2, %s23
        %v292 = vld [vmem:[%s3] sm:$0x1]
        %v293 = vld [vmem:[%s273] sm:$0xff]
        %v294 = vld [vmem:[%s273 + $0x8] sm:$0xff]
        %v295 = vld [vmem:[%s2] sm:$0xff]
        %v297 = vlaneseq
        %v298 = vshrl.u32 %v297, 7
        %v299 = vsub.s32 0, %v298
        %v300 = vrot.slane %v292, %v299
        %vm302 = vcmask 64512
        %v304 = vsel %vm302, %v293, 0
        %v307 = vsel %vm302, %v294, 0
        %309 = vmatprep.subr.mxu0 0.0
        %310 = vmatpush1.msra.mxu0 0.0
        %311 = vmatprep.subr.mxu0 0.0
        %312 = vmatpush1.msra.mxu0 0.0
        %313 = vmatprep.subr.mxu0 0.0
        %314 = vmatpush1.msra.mxu0 0.0
        %315 = vmatprep.subr.mxu0 0.0
        %316 = vmatpush1.msra.mxu0 0.0
        %317 = vmatprep.subr.mxu0 0.0
        %318 = vmatpush1.msra.mxu0 0.0
        %319 = vmatprep.subr.mxu0 0.0
        %320 = vmatpush1.msra.mxu0 0.0
        %321 = vmatprep.subr.mxu0 0.0
        %322 = vmatpush1.msra.mxu0 0.0
        %323 = vmatprep.subr.mxu0 0.0
        %324 = vmatpush1.msra.mxu0 0.0
        %325 = vmatprep.subr.mxu0 0.0
        %326 = vmatpush1.msra.mxu0 0.0
        %327 = vmatprep.subr.mxu0 0.0
        %328 = vmatpush1.msra.mxu0 0.0
        %329 = vmatprep.subr.mxu0 0.0
        %330 = vmatpush1.msra.mxu0 0.0
        %331 = vmatprep.subr.mxu0 0.0
        %332 = vmatpush1.msra.mxu0 0.0
        %333 = vmatprep.subr.mxu0 0.0
        %334 = vmatpush1.msra.mxu0 0.0
        %335 = vmatprep.subr.mxu0 0.0
        %336 = vmatpush1.msra.mxu0 0.0
        %337 = vmatprep.subr.mxu0 0.0
        %338 = vmatpush1.msra.mxu0 0.0
        %339 = vmatprep.subr.mxu0 0.0
        %340 = vmatpush1.msra.mxu0 %v295
        %341 = vmatprep.subr.mxu0 0.0
        %342 = vmatpush2.msra.mxu0 0.0
        %343 = vmatprep.subr.mxu0 0.0
        %344 = vmatpush2.msra.mxu0 0.0
        %345 = vmatprep.subr.mxu0 0.0
        %346 = vmatpush2.msra.mxu0 0.0
        %347 = vmatprep.subr.mxu0 0.0
        %348 = vmatpush2.msra.mxu0 0.0
        %349 = vmatprep.subr.mxu0 0.0
        %350 = vmatpush2.msra.mxu0 0.0
        %351 = vmatprep.subr.mxu0 0.0
        %352 = vmatpush2.msra.mxu0 0.0
        %353 = vmatprep.subr.mxu0 0.0
        %354 = vmatpush2.msra.mxu0 0.0
        %355 = vmatprep.subr.mxu0 0.0
        %356 = vmatpush2.msra.mxu0 0.0
        %357 = vmatprep.subr.mxu0 0.0
        %358 = vmatpush2.msra.mxu0 0.0
        %359 = vmatprep.subr.mxu0 0.0
        %360 = vmatpush2.msra.mxu0 0.0
        %361 = vmatprep.subr.mxu0 0.0
        %362 = vmatpush2.msra.mxu0 0.0
        %363 = vmatprep.subr.mxu0 0.0
        %364 = vmatpush2.msra.mxu0 0.0
        %365 = vmatprep.subr.mxu0 0.0
        %366 = vmatpush2.msra.mxu0 0.0
        %367 = vmatprep.subr.mxu0 0.0
        %368 = vmatpush2.msra.mxu0 0.0
        %369 = vmatprep.subr.mxu0 0.0
        %370 = vmatpush2.msra.mxu0 0.0
        %371 = vmatprep.subr.mxu0 0.0
        %372 = vmatpush2.msra.mxu0 0.0
        %373 = vmatprep.mubr.f32.mxu0 0.0
        %374 = vmatmul.mubr.f32.gmra.mxu0 %v304
        %v375 = vpop.f32.mrf.mxu0
        %v376 = vadd.f32 %v300, %v375
        %v377 = vpop.f32.mrf.mxu0
        %378 = vmatprep.mubr.f32.mxu0 0.0
        %379 = vmatmul.mubr.f32.gmra.mxu0 %v307
        %v380 = vpop.f32.mrf.mxu0
        %v381 = vadd.f32 %v300, %v380
        %v382 = vpop.f32.mrf.mxu0
        %383 = vdwg.mxu0
        %384 = vst [vmem:[%s260] sm:$0xff] %v376
        %385 = vst [vmem:[%s260 + $0x8] sm:$0xff] %v381
        %s386 = sand.u32 %s142, 1
        %s387 = scalar_lea.sflag [#allocation3], %s386
        %s388 = sand.u32 %s142, 1
        %s389 = smul.addr %s388, 16
        %s390 = scalar_lea.vmem [#allocation2], %s389
        // Predicated region
        $region37: #{tpu_custom_call.1} parent=35 // pred_check
          %p391 = pneg %p152
        $region38: #{tpu_custom_call.1} parent=35 // pred_check_branch
          %393 = sbr.rel (%p391) target = $region40
        $region39: #{tpu_custom_call.1} parent=35 // pred_region
          %s394 = smul.u32 2, %s23
          %s396 = ssub.s32 256, 256
          %397 = vsyncadd %s387, %s396
          %s398 = smul.addr %s22, 2
          %s399 = sadd.s32 %s394, %s398
          %s400 = smul.addr %s399, 128
          %s401 = scalar_lea.hbm %s4, %s400
          %s402 = sshll.u32 %s390, 4
          %s403 = int_to_ptr.vmem [resolvable:$true] %s402
          %408 = dma.vmem_to_hbm [thread:$0]  %s403, 256, %s401, %s387, 128, 128, 8
        $region40: #{tpu_custom_call.1} parent=35 // pred_fallthru
          _
      $region36: #{tpu_custom_call.1} parent=5 // pred_fallthru
        _
      %p409 = scmp.le.s32.totalorder 2, %s13
      // Predicated region
      $region41: #{tpu_custom_call.1} parent=5 // pred_check
        %p410 = pneg %p409
      $region42: #{tpu_custom_call.1} parent=5 // pred_check_branch
        %412 = sbr.rel (%p410) target = $region44
      $region43: #{tpu_custom_call.1} parent=5 // pred_region
        %s413 = ssub.s32 %s13, 2
        // Predicated region
        $region45: #{tpu_custom_call.1} parent=43 // pred_check
          %p414 = pneg %p158
        $region46: #{tpu_custom_call.1} parent=43 // pred_check_branch
          %416 = sbr.rel (%p414) target = $region48
        $region47: #{tpu_custom_call.1} parent=43 // pred_region
          %s417 = sand.u32 %s143, 1
          %s418 = scalar_lea.sflag [#allocation3], %s417
          %s419 = sand.u32 %s143, 1
          %s420 = smul.addr %s419, 16
          %s421 = scalar_lea.vmem [#allocation2], %s420
          %422 = dma.done %s418, 256
        $region48: #{tpu_custom_call.1} parent=43 // pred_fallthru
          _
      $region44: #{tpu_custom_call.1} parent=5 // pred_fallthru
        _
    $region6: #{tpu_custom_call.1} parent=1 // loop_footer
      %s17 = sadd.s32 1, %s13
    $region7: #{tpu_custom_call.1} parent=1 // loop_footer_branch
      %12 = sbr.rel target = $region3
    $region8: #{tpu_custom_call.1} parent=1 // loop_exit
      _
    %423 = vsyncpa [#allocation3], 1
    %s424 = scalar_lea.sflag [#allocation3], 1
    %425 = vsyncpa %s424, 1

</llo_original>
